<compile_context>
chip_gen: v7x
topology: tpu7x:2x2x1
jax: 0.10.0
libtpu: 0.0.40
codegen_flags: <defaults>
</compile_context>

<pallas_src>
import jax
import jax.numpy as jnp
from jax import lax
from jax.experimental import pallas as pl
from jax.experimental.pallas import tpu as pltpu


def _round_up(x, m):
    return ((x + m - 1) // m) * m


def linear_kernel(x_ref, wt_ref, b_ref, o_ref):
    # x: (TM, Cin)   wt: (Cin, Npad)   b: (1, Cout)   o: (TM, Cout)
    # Canonical (M,K)x(K,N) contraction -> MXU, no relayout of W.
    acc = lax.dot_general(
        x_ref[...], wt_ref[...],
        dimension_numbers=(((1,), (0,)), ((), ())),
        preferred_element_type=jnp.float32,
    )                                            # (TM, Npad) f32
    cout = o_ref.shape[-1]
    # Store only the real output lanes; padded lanes never leave VMEM.
    o_ref[...] = (acc[:, :cout] + b_ref[...]).astype(o_ref.dtype)


def prepare_linear_params(w, b):
    """One-time (init-side) parameter prep.

    w: (Cout, Cin), b: (Cout,)  ->  wt: (Cin, Npad) lane-dense pre-transposed
    weight (canonical MXU feed), b2: (1, Cout). Done once so the per-call
    forward path contains no parameter padding / transposition ops."""
    cout, cin = w.shape
    npad = _round_up(cout, 128)
    wt = jnp.pad(w.T, ((0, 0), (0, npad - cout)))   # (Cin, Npad)
    b2 = b.reshape(1, cout)
    return wt, b2


_TM_CAP = 1024   # rows per grid step once the batch gets large


def dummy_model_forward(x, wt, b2):
    """x: (B, Cin) f32, wt: (Cin, Npad) f32, b2: (1, Cout) f32 -> (B, Cout)."""
    B, Cin = x.shape
    Npad = wt.shape[1]
    Cout = b2.shape[1]

    if B <= _TM_CAP:
        # Single grid step: block dims equal to the full array dims are always
        # legal, so no batch padding and no per-call pad of x at all.
        TM, Bp, xp = B, B, x
    else:
        # Multi-step: TM multiple of 8 chosen to minimize wasted padded rows.
        n_tiles = pl.cdiv(B, _TM_CAP)
        TM = _round_up(pl.cdiv(B, n_tiles), 8)
        Bp = _round_up(B, TM)
        xp = jnp.pad(x, ((0, Bp - B), (0, 0)))

    grid = (Bp // TM,)

    # Advisory cost with the true (unpadded) problem dims.
    itemsize = jnp.dtype(x.dtype).itemsize
    cost = pl.CostEstimate(
        flops=2 * B * Cin * Cout,
        transcendentals=0,
        bytes_accessed=(B * Cin + Cin * Cout + Cout + B * Cout) * itemsize,
    )

    out = pl.pallas_call(
        linear_kernel,
        out_shape=jax.ShapeDtypeStruct((Bp, Cout), x.dtype),
        grid_spec=pltpu.PrefetchScalarGridSpec(
            num_scalar_prefetch=0,
            grid=grid,
            in_specs=[
                pl.BlockSpec((TM, Cin), lambda i: (i, 0)),    # batch-tiled x
                pl.BlockSpec((Cin, Npad), lambda i: (0, 0)),  # resident W^T
                pl.BlockSpec((1, Cout), lambda i: (0, 0)),    # resident bias
            ],
            out_specs=pl.BlockSpec((TM, Cout), lambda i: (i, 0)),
        ),
        compiler_params=pltpu.CompilerParams(
            dimension_semantics=("parallel",),
        ),
        cost_estimate=cost,
    )(xp, wt, b2)

    return out if Bp == B else out[:B]


if __name__ == "__main__":
    in_channels = 120
    out_channels = 2
    batch = 8

    key = jax.random.PRNGKey(0)
    kx, kw, kb = jax.random.split(key, 3)

    # Deterministic parameter init mimicking PyTorch nn.Linear default:
    # uniform(-1/sqrt(in_channels), 1/sqrt(in_channels)).
    bound = 1.0 / (in_channels ** 0.5)
    w = jax.random.uniform(kw, (out_channels, in_channels),
                           minval=-bound, maxval=bound, dtype=jnp.float32)
    b = jax.random.uniform(kb, (out_channels,),
                           minval=-bound, maxval=bound, dtype=jnp.float32)
    x = jax.random.normal(kx, (batch, in_channels), dtype=jnp.float32)

    # One-time parameter prep (hoisted out of the per-call forward path).
    wt, b2 = prepare_linear_params(w, b)

    y = dummy_model_forward(x, wt, b2)
    jax.block_until_ready(y)

    # Reference check against plain JAX.
    y_ref = x @ w.T + b
    assert y.shape == (batch, out_channels)
    assert jnp.allclose(y, y_ref, atol=1e-5, rtol=1e-5)

    print("KERNEL_OK")
</pallas_src>

<mosaic_0001>
module attributes {stable_mosaic.version = 11 : i64} {
  func.func @linear_kernel(%arg0: i32, %arg1: memref<8x120xf32, #tpu.memory_space<vmem>>, %arg2: memref<120x128xf32, #tpu.memory_space<vmem>>, %arg3: memref<1x2xf32, #tpu.memory_space<vmem>>, %arg4: memref<8x2xf32, #tpu.memory_space<vmem>>) attributes {dimension_semantics = [#tpu.dimension_semantics<parallel>], iteration_bounds = array<i64: 1>, scalar_prefetch = 0 : i64, scratch_operands = 0 : i64, tpu.core_type = #tpu.core_type<tc>, window_params = [{transform_indices = @transform_0, window_bounds = array<i64: 8, 120>}, {pipeline_mode = #tpu.pipeline_mode<synchronous>, transform_indices = @transform_1, window_bounds = array<i64: 120, 128>}, {pipeline_mode = #tpu.pipeline_mode<synchronous>, transform_indices = @transform_2, window_bounds = array<i64: 1, 2>}, {transform_indices = @transform_3, window_bounds = array<i64: 8, 2>}]} {
    %c0 = arith.constant 0 : index
    %c0_0 = arith.constant 0 : index
    %0 = vector.load %arg1[%c0, %c0_0] : memref<8x120xf32, #tpu.memory_space<vmem>>, vector<8x120xf32>
    %c0_1 = arith.constant 0 : index
    %c0_2 = arith.constant 0 : index
    %1 = vector.load %arg2[%c0_1, %c0_2] : memref<120x128xf32, #tpu.memory_space<vmem>>, vector<120x128xf32>
    %cst = arith.constant dense<0.000000e+00> : vector<8x128xf32>
    %2 = tpu.matmul %0, %1, %cst {dimension_numbers = #tpu.dot_dimension_numbers<[1], [0], [0], [1], [0, 0, 1, 1], [], []>} : vector<8x120xf32>, vector<120x128xf32>, vector<8x128xf32> -> vector<8x128xf32>
    %3 = vector.extract_strided_slice %2 {offsets = [0, 0], sizes = [8, 2], strides = [1, 1]} : vector<8x128xf32> to vector<8x2xf32>
    %c0_3 = arith.constant 0 : index
    %c0_4 = arith.constant 0 : index
    %4 = vector.load %arg3[%c0_3, %c0_4] : memref<1x2xf32, #tpu.memory_space<vmem>>, vector<1x2xf32>
    %5 = vector.broadcast %4 : vector<1x2xf32> to vector<8x2xf32>
    %6 = arith.addf %3, %5 : vector<8x2xf32>
    %c0_5 = arith.constant 0 : index
    %c0_6 = arith.constant 0 : index
    %7 = vector.load %arg4[%c0_5, %c0_6] : memref<8x2xf32, #tpu.memory_space<vmem>>, vector<8x2xf32>
    tpu.vector_store %arg4[%c0_5, %c0_6], %6 {strides = array<i32>} : memref<8x2xf32, #tpu.memory_space<vmem>>, vector<8x2xf32>,
    return
  }
  func.func @transform_0(%arg0: i32) -> (i32, i32) {
    %c0_i32 = arith.constant 0 : i32
    %c0_i32_0 = arith.constant 0 : i32
    return %arg0, %c0_i32 : i32, i32
  }
  func.func @transform_1(%arg0: i32) -> (i32, i32) {
    %c0_i32 = arith.constant 0 : i32
    %c0_i32_0 = arith.constant 0 : i32
    %c0_i32_1 = arith.constant 0 : i32
    return %c0_i32, %c0_i32_0 : i32, i32
  }
  func.func @transform_2(%arg0: i32) -> (i32, i32) {
    %c0_i32 = arith.constant 0 : i32
    %c0_i32_0 = arith.constant 0 : i32
    %c0_i32_1 = arith.constant 0 : i32
    return %c0_i32, %c0_i32_0 : i32, i32
  }
  func.func @transform_3(%arg0: i32) -> (i32, i32) {
    %c0_i32 = arith.constant 0 : i32
    %c0_i32_0 = arith.constant 0 : i32
    return %arg0, %c0_i32 : i32, i32
  }
}

</mosaic_0001>

<llo_original>
// kernel: tpu_custom_call.1
$region0: #{tpu_custom_call.1}
  #allocation0 [shape = 'u32[]', space=smem, size = 0x4, offset = 0x4, fixed_abs, tag = 'smem constant byte address 0x4 - core index']
  #allocation1 [shape = 'u32[144,128]{1,0:T(1,128)}', space=vmem, size = 0x12000, scoped, tag = 'internal scratch']
  %s0 = inlined_call_operand.hbm [shape: f32[8,120], index: 0, kind: input, shape index: {}]
  %s1 = inlined_call_operand.hbm [shape: f32[120,128], index: 1, kind: input, shape index: {}]
  %s2 = inlined_call_operand.vmem [shape: f32[1,2], index: 2, kind: input, shape index: {}]
  %s3 = inlined_call_operand.vmem [shape: f32[8,2], index: 3, kind: output, shape index: {}]
  %s4 = sld [smem:[#allocation0]]
  $region30: #{tpu_custom_call.1} parent=0
    _
  %s6 = ssub.s32 1, %s4
  %s7 = scalar_select 0, %s6, %s4
  $region1: #{tpu_custom_call.1} parent=0
    #allocation2 [shape = 'u8[4096]{0}', space=vmem, size = 0x1000, scoped, tag = 'input window, operand 0, single buffered']
    #allocation3 [shape = 's32[1]{0}', space=sflag, size = 0x4, scoped, tag = 'scoped memory for tpu_custom_call.1']
    #allocation4 [shape = 'u8[61440]{0}', space=vmem, size = 0xf000, scoped, tag = 'input window, operand 1, single buffered']
    #allocation5 [shape = 's32[1]{0}', space=sflag, size = 0x4, scoped, tag = 'scoped memory for tpu_custom_call.1']
    %8 = vsyncpa [#allocation3], 0
    %9 = vsyncpa [#allocation5], 0
    // Predicated region
    $region2: #{tpu_custom_call.1} parent=1 // pred_check
      _
    $region3: #{tpu_custom_call.1} parent=1 // pred_check_branch
      %11 = sbr.rel (0) target = $region5
    $region4: #{tpu_custom_call.1} parent=1 // pred_region
      %s13 = ssub.s32 128, 128
      %14 = vsyncadd [#allocation3], %s13
      %s16 = sshll.u32 [#allocation2], 4
      %s17 = int_to_ptr.vmem [resolvable:$true] %s16
      %19 = dma.hbm_to_vmem [thread:$0]  %s0, 128, %s17, [#allocation3]
    $region5: #{tpu_custom_call.1} parent=1 // pred_fallthru
      _
    // Predicated region
    $region6: #{tpu_custom_call.1} parent=1 // pred_check
      _
    $region7: #{tpu_custom_call.1} parent=1 // pred_check_branch
      %21 = sbr.rel (0) target = $region9
    $region8: #{tpu_custom_call.1} parent=1 // pred_region
      %s23 = ssub.s32 1920, 1920
      %24 = vsyncadd [#allocation5], %s23
      %s25 = sshll.u32 [#allocation4], 4
      %s26 = int_to_ptr.vmem [resolvable:$true] %s25
      %31 = dma.hbm_to_vmem [thread:$0]  %s1, 1920, %s26, [#allocation5], 128, 128, 8
    $region9: #{tpu_custom_call.1} parent=1 // pred_fallthru
      _
    // Predicated region
    $region10: #{tpu_custom_call.1} parent=1 // pred_check
      _
    $region11: #{tpu_custom_call.1} parent=1 // pred_check_branch
      %33 = sbr.rel (0) target = $region13
    $region12: #{tpu_custom_call.1} parent=1 // pred_region
      _
    $region13: #{tpu_custom_call.1} parent=1 // pred_fallthru
      _
    // Predicated region
    $region14: #{tpu_custom_call.1} parent=1 // pred_check
      _
    $region15: #{tpu_custom_call.1} parent=1 // pred_check_branch
      %35 = sbr.rel (0) target = $region17
    $region16: #{tpu_custom_call.1} parent=1 // pred_region
      %36 = dma.done [#allocation3], 128
    $region17: #{tpu_custom_call.1} parent=1 // pred_fallthru
      _
    // Predicated region
    $region18: #{tpu_custom_call.1} parent=1 // pred_check
      _
    $region19: #{tpu_custom_call.1} parent=1 // pred_check_branch
      %38 = sbr.rel (0) target = $region21
    $region20: #{tpu_custom_call.1} parent=1 // pred_region
      %39 = dma.done [#allocation5], 1920
    $region21: #{tpu_custom_call.1} parent=1 // pred_fallthru
      _
    %v40 = vld [vmem:[#allocation2] sm:$0xff]
    %v41 = vld [vmem:[#allocation4] sm:$0xff]
    %v42 = vld [vmem:[#allocation4 + $0x8] sm:$0xff]
    %v43 = vld [vmem:[#allocation4 + $0x10] sm:$0xff]
    %v44 = vld [vmem:[#allocation4 + $0x18] sm:$0xff]
    %v45 = vld [vmem:[#allocation4 + $0x20] sm:$0xff]
    %v46 = vld [vmem:[#allocation4 + $0x28] sm:$0xff]
    %v47 = vld [vmem:[#allocation4 + $0x30] sm:$0xff]
    %v48 = vld [vmem:[#allocation4 + $0x38] sm:$0xff]
    %v49 = vld [vmem:[#allocation4 + $0x40] sm:$0xff]
    %v50 = vld [vmem:[#allocation4 + $0x48] sm:$0xff]
    %v51 = vld [vmem:[#allocation4 + $0x50] sm:$0xff]
    %v52 = vld [vmem:[#allocation4 + $0x58] sm:$0xff]
    %v53 = vld [vmem:[#allocation4 + $0x60] sm:$0xff]
    %v54 = vld [vmem:[#allocation4 + $0x68] sm:$0xff]
    %v55 = vld [vmem:[#allocation4 + $0x70] sm:$0xff]
    %vm56 = vcmask 982016
    %v58 = vsel %vm56, %v40, 0
    %60 = vmatprep.subr.mxu0 0.0
    %61 = vmatpush1.msra.mxu0 %v41
    %62 = vmatprep.subr.mxu0 0.0
    %63 = vmatpush1.msra.mxu0 %v42
    %64 = vmatprep.subr.mxu0 0.0
    %65 = vmatpush1.msra.mxu0 %v43
    %66 = vmatprep.subr.mxu0 0.0
    %67 = vmatpush1.msra.mxu0 %v44
    %68 = vmatprep.subr.mxu0 0.0
    %69 = vmatpush1.msra.mxu0 %v45
    %70 = vmatprep.subr.mxu0 0.0
    %71 = vmatpush1.msra.mxu0 %v46
    %72 = vmatprep.subr.mxu0 0.0
    %73 = vmatpush1.msra.mxu0 %v47
    %74 = vmatprep.subr.mxu0 0.0
    %75 = vmatpush1.msra.mxu0 %v48
    %76 = vmatprep.subr.mxu0 0.0
    %77 = vmatpush1.msra.mxu0 %v49
    %78 = vmatprep.subr.mxu0 0.0
    %79 = vmatpush1.msra.mxu0 %v50
    %80 = vmatprep.subr.mxu0 0.0
    %81 = vmatpush1.msra.mxu0 %v51
    %82 = vmatprep.subr.mxu0 0.0
    %83 = vmatpush1.msra.mxu0 %v52
    %84 = vmatprep.subr.mxu0 0.0
    %85 = vmatpush1.msra.mxu0 %v53
    %86 = vmatprep.subr.mxu0 0.0
    %87 = vmatpush1.msra.mxu0 %v54
    %88 = vmatprep.subr.mxu0 0.0
    %89 = vmatpush1.msra.mxu0 %v55
    %90 = vmatprep.subr.mxu0 0.0
    %91 = vmatpush1.msra.mxu0 0.0
    %92 = vmatprep.subr.mxu0 0.0
    %93 = vmatpush1.msra.mxu0 0.0
    %94 = vmatprep.subr.mxu0 0.0
    %95 = vmatpush1.msra.mxu0 0.0
    %96 = vmatprep.subr.mxu0 0.0
    %97 = vmatpush1.msra.mxu0 0.0
    %98 = vmatprep.subr.mxu0 0.0
    %99 = vmatpush1.msra.mxu0 0.0
    %100 = vmatprep.subr.mxu0 0.0
    %101 = vmatpush1.msra.mxu0 0.0
    %102 = vmatprep.subr.mxu0 0.0
    %103 = vmatpush1.msra.mxu0 0.0
    %104 = vmatprep.subr.mxu0 0.0
    %105 = vmatpush1.msra.mxu0 0.0
    %106 = vmatprep.subr.mxu0 0.0
    %107 = vmatpush1.msra.mxu0 0.0
    %108 = vmatprep.subr.mxu0 0.0
    %109 = vmatpush1.msra.mxu0 0.0
    %110 = vmatprep.subr.mxu0 0.0
    %111 = vmatpush1.msra.mxu0 0.0
    %112 = vmatprep.subr.mxu0 0.0
    %113 = vmatpush1.msra.mxu0 0.0
    %114 = vmatprep.subr.mxu0 0.0
    %115 = vmatpush1.msra.mxu0 0.0
    %116 = vmatprep.subr.mxu0 0.0
    %117 = vmatpush1.msra.mxu0 0.0
    %118 = vmatprep.subr.mxu0 0.0
    %119 = vmatpush1.msra.mxu0 0.0
    %120 = vmatprep.subr.mxu0 0.0
    %121 = vmatpush1.msra.mxu0 0.0
    %122 = vmatprep.subr.mxu0 0.0
    %123 = vmatpush1.msra.mxu0 0.0
    %124 = vmatprep.mubr.f32.mxu0 0.0
    %125 = vmatmul.mubr.f32.gmra.mrb[0].mxu0 %v58
    %v126 = vpop.f32.mrb[0].mxu0
    %v127 = vadd.f32 0.0, %v126
    %v128 = vpop.f32.mrb[0].mxu0
    %129 = vdwg.mxu0
    %v130 = vld [vmem:[%s2] sm:$0x1]
    %v132 = vlaneseq
    %v133 = vshrl.u32 %v132, 7
    %v134 = vsub.s32 0, %v133
    %v135 = vrot.slane %v130, %v134
    %v137 = vadd.f32 %v127, %v135
    %vm138 = vcmask 15360
    %139 = vst.msk [vmem:[%s3] sm:$0xff] %vm138, %v137
    // Predicated region
    $region22: #{tpu_custom_call.1} parent=1 // pred_check
      _
    $region23: #{tpu_custom_call.1} parent=1 // pred_check_branch
      %141 = sbr.rel (0) target = $region25
    $region24: #{tpu_custom_call.1} parent=1 // pred_region
      _
    $region25: #{tpu_custom_call.1} parent=1 // pred_fallthru
      _
    // Predicated region
    $region26: #{tpu_custom_call.1} parent=1 // pred_check
      _
    $region27: #{tpu_custom_call.1} parent=1 // pred_check_branch
      %143 = sbr.rel (0) target = $region29
    $region28: #{tpu_custom_call.1} parent=1 // pred_region
      _
    $region29: #{tpu_custom_call.1} parent=1 // pred_fallthru
      _
    %144 = vsyncpa [#allocation3], 1
    %145 = vsyncpa [#allocation5], 1

</llo_original>
